<compile_context>
chip_gen: v5e
topology: v5e:2x2
jax: 0.10.0
libtpu: 0.0.40
codegen_flags: <defaults>
</compile_context>

<pallas_src>
import jax
import jax.numpy as jnp
from jax import lax
from jax.experimental import pallas as pl
from jax.experimental.pallas import tpu as pltpu


def _round_up(n, m):
    return ((n + m - 1) // m) * m


def mlp_kernel(x_ref, w1_ref, b1_ref, w2_ref, b2_ref, w3_ref, b3_ref, o_ref):
    """Fused 3-layer MLP on one batch tile.

    x_ref:  (bm, D)    batch tile (rows on sublanes, features on lanes)
    w1_ref: (D, 16), b1_ref: (1, 16)
    w2_ref: (16, 8), b2_ref: (1, 8)
    w3_ref: (1, 8),  b3_ref: (1, 1)   # W3 kept in PyTorch (out, in) layout
    o_ref:  (1, bm)    lane-dense output row (batch on lanes)
    """
    x = x_ref[...]

    # Layer 1: Linear + ReLU  (MXU matmul, f32 accumulate; VPU max)
    h1 = jnp.dot(x, w1_ref[...], preferred_element_type=jnp.float32) + b1_ref[...]
    h1 = jnp.maximum(h1, 0.0)                        # (bm, 16)

    # Layer 2: Linear + ReLU
    h2 = jnp.dot(h1, w2_ref[...], preferred_element_type=jnp.float32) + b2_ref[...]
    h2 = jnp.maximum(h2, 0.0)                        # (bm, 8)

    # Layer 3: contract h2's 8-wide feature dim against the (1, 8) W3 row.
    # Result lands directly in lane-dense (1, bm) layout -> full-width stores.
    out = lax.dot_general(
        w3_ref[...], h2,
        dimension_numbers=(((1,), (1,)), ((), ())),
        preferred_element_type=jnp.float32,
    )                                                # (1, bm)
    out = out + b3_ref[...]                          # (1, 1) bias broadcasts
    o_ref[...] = out.astype(o_ref.dtype)


def my_model_forward(x, params, *, bm=2048):
    """Run My_Model forward. x: (B, D) float32 -> (B,) float32."""
    B, D = x.shape
    w1, b1, w2, b2, w3, b3 = params  # PyTorch-convention shapes (out, in), (out,)

    # Layout glue only (tiny host-side work):
    #   W1, W2 transposed to (in, out) so the kernel does plain x @ W.
    #   W3 stays in its native (1, 8) layout (kernel contracts it directly).
    #   Biases lifted to 2-D rows.
    w1t = w1.T                       # (D, 16)
    w2t = w2.T                       # (16, 8)
    b1r = b1.reshape(1, -1)          # (1, 16)
    b2r = b2.reshape(1, -1)          # (1, 8)
    b3r = b3.reshape(1, -1)          # (1, 1)

    # Lane-dense batch tile: multiple of 128, no larger than the padded batch.
    # Even at bm=2048 / D=128 the double-buffered x tile is ~2 MiB, far under
    # the v7x 32 MiB scoped-VMEM default, so no vmem_limit override is needed.
    bm = max(128, min(bm, _round_up(B, 128)))
    B_pad = _round_up(B, bm)
    if B_pad != B:
        x = jnp.pad(x, ((0, B_pad - B), (0, 0)))     # pad rows; sliced off below

    grid = (B_pad // bm,)

    out = pl.pallas_call(
        mlp_kernel,
        out_shape=jax.ShapeDtypeStruct((1, B_pad), jnp.float32),
        grid_spec=pltpu.PrefetchScalarGridSpec(
            num_scalar_prefetch=0,
            grid=grid,
            in_specs=[
                pl.BlockSpec((bm, D), lambda i: (i, 0)),   # x batch tile
                pl.BlockSpec((D, 16), lambda i: (0, 0)),   # W1^T (resident; constant block idx => no re-DMA)
                pl.BlockSpec((1, 16), lambda i: (0, 0)),   # b1
                pl.BlockSpec((16, 8), lambda i: (0, 0)),   # W2^T
                pl.BlockSpec((1, 8), lambda i: (0, 0)),    # b2
                pl.BlockSpec((1, 8), lambda i: (0, 0)),    # W3 (native (out, in))
                pl.BlockSpec((1, 1), lambda i: (0, 0)),    # b3
            ],
            out_specs=pl.BlockSpec((1, bm), lambda i: (0, i)),  # lane-dense row
        ),
        compiler_params=pltpu.CompilerParams(
            dimension_semantics=("parallel",),   # megacore shards the batch axis
        ),
    )(x, w1t, b1r, w2t, b2r, w3, b3r)

    # (1, B_pad) -> (B,): squeeze(1)-equivalent + drop padding rows.
    return out[0, :B]


def init_params(key, input_dim):
    """Deterministic synthetic parameters with PyTorch Linear shapes (out, in)."""
    k1, k2, k3, k4, k5, k6 = jax.random.split(key, 6)
    w1 = jax.random.normal(k1, (16, input_dim), jnp.float32) * 0.1
    b1 = jax.random.normal(k2, (16,), jnp.float32) * 0.1
    w2 = jax.random.normal(k3, (8, 16), jnp.float32) * 0.1
    b2 = jax.random.normal(k4, (8,), jnp.float32) * 0.1
    w3 = jax.random.normal(k5, (1, 8), jnp.float32) * 0.1
    b3 = jax.random.normal(k6, (1,), jnp.float32) * 0.1
    return (w1, b1, w2, b2, w3, b3)


def reference_forward(x, params):
    """Pure-JAX reference matching the PyTorch module semantics."""
    w1, b1, w2, b2, w3, b3 = params
    h = jnp.maximum(x @ w1.T + b1, 0.0)
    h = jnp.maximum(h @ w2.T + b2, 0.0)
    y = h @ w3.T + b3          # (B, 1)
    return y[:, 0]             # squeeze(1)


if __name__ == "__main__":
    key = jax.random.PRNGKey(0)
    kx, kp, kx2, kp2 = jax.random.split(key, 4)

    # Small shapes consistent with the module: (batch, input_dim).
    B, D = 8, 32
    x = jax.random.normal(kx, (B, D), jnp.float32)
    params = init_params(kp, D)
    y = jax.block_until_ready(my_model_forward(x, params))
    y_ref = reference_forward(x, params)
    assert y.shape == (B,), y.shape
    assert jnp.allclose(y, y_ref, atol=1e-5, rtol=1e-5), (y, y_ref)

    # Exercise the padding + multi-tile grid path (B not divisible by the tile).
    B2, D2 = 300, 24
    x2 = jax.random.normal(kx2, (B2, D2), jnp.float32)
    params2 = init_params(kp2, D2)
    y2 = jax.block_until_ready(my_model_forward(x2, params2, bm=128))
    y2_ref = reference_forward(x2, params2)
    assert y2.shape == (B2,), y2.shape
    assert jnp.allclose(y2, y2_ref, atol=1e-5, rtol=1e-5), (y2, y2_ref)

    print("KERNEL_OK")
</pallas_src>

<mosaic_0001>
module attributes {stable_mosaic.version = 11 : i64} {
  func.func @mlp_kernel(%arg0: i32, %arg1: memref<128x32xf32, #tpu.memory_space<vmem>>, %arg2: memref<32x16xf32, #tpu.memory_space<vmem>>, %arg3: memref<1x16xf32, #tpu.memory_space<vmem>>, %arg4: memref<16x8xf32, #tpu.memory_space<vmem>>, %arg5: memref<1x8xf32, #tpu.memory_space<vmem>>, %arg6: memref<1x8xf32, #tpu.memory_space<vmem>>, %arg7: memref<1x1xf32, #tpu.memory_space<vmem>>, %arg8: memref<1x128xf32, #tpu.memory_space<vmem>>) attributes {dimension_semantics = [#tpu.dimension_semantics<parallel>], iteration_bounds = array<i64: 1>, scalar_prefetch = 0 : i64, scratch_operands = 0 : i64, tpu.core_type = #tpu.core_type<tc>, window_params = [{transform_indices = @transform_0, window_bounds = array<i64: 128, 32>}, {pipeline_mode = #tpu.pipeline_mode<synchronous>, transform_indices = @transform_1, window_bounds = array<i64: 32, 16>}, {pipeline_mode = #tpu.pipeline_mode<synchronous>, transform_indices = @transform_2, window_bounds = array<i64: 1, 16>}, {pipeline_mode = #tpu.pipeline_mode<synchronous>, transform_indices = @transform_3, window_bounds = array<i64: 16, 8>}, {pipeline_mode = #tpu.pipeline_mode<synchronous>, transform_indices = @transform_4, window_bounds = array<i64: 1, 8>}, {pipeline_mode = #tpu.pipeline_mode<synchronous>, transform_indices = @transform_5, window_bounds = array<i64: 1, 8>}, {pipeline_mode = #tpu.pipeline_mode<synchronous>, transform_indices = @transform_6, window_bounds = array<i64: 1, 1>}, {transform_indices = @transform_7, window_bounds = array<i64: 1, 128>}]} {
    %c0 = arith.constant 0 : index
    %c0_0 = arith.constant 0 : index
    %0 = vector.load %arg1[%c0, %c0_0] : memref<128x32xf32, #tpu.memory_space<vmem>>, vector<128x32xf32>
    %c0_1 = arith.constant 0 : index
    %c0_2 = arith.constant 0 : index
    %1 = vector.load %arg2[%c0_1, %c0_2] : memref<32x16xf32, #tpu.memory_space<vmem>>, vector<32x16xf32>
    %cst = arith.constant dense<0.000000e+00> : vector<128x16xf32>
    %2 = tpu.matmul %0, %1, %cst {dimension_numbers = #tpu.dot_dimension_numbers<[1], [0], [0], [1], [0, 0, 1, 1], [], []>} : vector<128x32xf32>, vector<32x16xf32>, vector<128x16xf32> -> vector<128x16xf32>
    %c0_3 = arith.constant 0 : index
    %c0_4 = arith.constant 0 : index
    %3 = vector.load %arg3[%c0_3, %c0_4] : memref<1x16xf32, #tpu.memory_space<vmem>>, vector<1x16xf32>
    %4 = vector.broadcast %3 : vector<1x16xf32> to vector<128x16xf32>
    %5 = arith.addf %2, %4 : vector<128x16xf32>
    %cst_5 = arith.constant 0.000000e+00 : f32
    %6 = vector.broadcast %cst_5 : f32 to vector<128x16xf32>
    %7 = arith.maximumf %5, %6 : vector<128x16xf32>
    %c0_6 = arith.constant 0 : index
    %c0_7 = arith.constant 0 : index
    %8 = vector.load %arg4[%c0_6, %c0_7] : memref<16x8xf32, #tpu.memory_space<vmem>>, vector<16x8xf32>
    %cst_8 = arith.constant dense<0.000000e+00> : vector<128x8xf32>
    %9 = tpu.matmul %7, %8, %cst_8 {dimension_numbers = #tpu.dot_dimension_numbers<[1], [0], [0], [1], [0, 0, 1, 1], [], []>} : vector<128x16xf32>, vector<16x8xf32>, vector<128x8xf32> -> vector<128x8xf32>
    %c0_9 = arith.constant 0 : index
    %c0_10 = arith.constant 0 : index
    %10 = vector.load %arg5[%c0_9, %c0_10] : memref<1x8xf32, #tpu.memory_space<vmem>>, vector<1x8xf32>
    %11 = vector.broadcast %10 : vector<1x8xf32> to vector<128x8xf32>
    %12 = arith.addf %9, %11 : vector<128x8xf32>
    %cst_11 = arith.constant 0.000000e+00 : f32
    %13 = vector.broadcast %cst_11 : f32 to vector<128x8xf32>
    %14 = arith.maximumf %12, %13 : vector<128x8xf32>
    %c0_12 = arith.constant 0 : index
    %c0_13 = arith.constant 0 : index
    %15 = vector.load %arg6[%c0_12, %c0_13] : memref<1x8xf32, #tpu.memory_space<vmem>>, vector<1x8xf32>
    %cst_14 = arith.constant dense<0.000000e+00> : vector<1x128xf32>
    %16 = tpu.matmul %15, %14, %cst_14 {dimension_numbers = #tpu.dot_dimension_numbers<[1], [1], [0], [0], [0, 0, 1, 0], [], []>} : vector<1x8xf32>, vector<128x8xf32>, vector<1x128xf32> -> vector<1x128xf32>
    %c0_15 = arith.constant 0 : index
    %c0_16 = arith.constant 0 : index
    %17 = vector.load %arg7[%c0_15, %c0_16] : memref<1x1xf32, #tpu.memory_space<vmem>>, vector<1x1xf32>
    %18 = vector.broadcast %17 : vector<1x1xf32> to vector<1x128xf32>
    %19 = arith.addf %16, %18 : vector<1x128xf32>
    %c0_17 = arith.constant 0 : index
    %c0_18 = arith.constant 0 : index
    %20 = vector.load %arg8[%c0_17, %c0_18] : memref<1x128xf32, #tpu.memory_space<vmem>>, vector<1x128xf32>
    tpu.vector_store %arg8[%c0_17, %c0_18], %19 {strides = array<i32>} : memref<1x128xf32, #tpu.memory_space<vmem>>, vector<1x128xf32>,
    return
  }
  func.func @transform_0(%arg0: i32) -> (i32, i32) {
    %c0_i32 = arith.constant 0 : i32
    %c0_i32_0 = arith.constant 0 : i32
    return %arg0, %c0_i32 : i32, i32
  }
  func.func @transform_1(%arg0: i32) -> (i32, i32) {
    %c0_i32 = arith.constant 0 : i32
    %c0_i32_0 = arith.constant 0 : i32
    %c0_i32_1 = arith.constant 0 : i32
    return %c0_i32, %c0_i32_0 : i32, i32
  }
  func.func @transform_2(%arg0: i32) -> (i32, i32) {
    %c0_i32 = arith.constant 0 : i32
    %c0_i32_0 = arith.constant 0 : i32
    %c0_i32_1 = arith.constant 0 : i32
    return %c0_i32, %c0_i32_0 : i32, i32
  }
  func.func @transform_3(%arg0: i32) -> (i32, i32) {
    %c0_i32 = arith.constant 0 : i32
    %c0_i32_0 = arith.constant 0 : i32
    %c0_i32_1 = arith.constant 0 : i32
    return %c0_i32, %c0_i32_0 : i32, i32
  }
  func.func @transform_4(%arg0: i32) -> (i32, i32) {
    %c0_i32 = arith.constant 0 : i32
    %c0_i32_0 = arith.constant 0 : i32
    %c0_i32_1 = arith.constant 0 : i32
    return %c0_i32, %c0_i32_0 : i32, i32
  }
  func.func @transform_5(%arg0: i32) -> (i32, i32) {
    %c0_i32 = arith.constant 0 : i32
    %c0_i32_0 = arith.constant 0 : i32
    %c0_i32_1 = arith.constant 0 : i32
    return %c0_i32, %c0_i32_0 : i32, i32
  }
  func.func @transform_6(%arg0: i32) -> (i32, i32) {
    %c0_i32 = arith.constant 0 : i32
    %c0_i32_0 = arith.constant 0 : i32
    %c0_i32_1 = arith.constant 0 : i32
    return %c0_i32, %c0_i32_0 : i32, i32
  }
  func.func @transform_7(%arg0: i32) -> (i32, i32) {
    %c0_i32 = arith.constant 0 : i32
    %c0_i32_0 = arith.constant 0 : i32
    return %c0_i32, %arg0 : i32, i32
  }
}

</mosaic_0001>

<llo_original>
// kernel: tpu_custom_call.1
$region0: #{tpu_custom_call.1}
  #allocation0 [shape = 'u32[]', space=smem, size = 0x4, offset = 0x4, fixed_abs, tag = 'smem constant byte address 0x4 - core index']
  #allocation1 [shape = 'u32[72,128]{1,0:T(1,128)}', space=vmem, size = 0x9000, scoped, tag = 'internal scratch']
  #allocation2 [shape = 'f32[1,1]{1,0:T(1,128)S(1)}', space=vmem, size = 0x200, scoped, tag = 'scoped memory for tpu_custom_call.1']
  %s0 = inlined_call_operand.vmem [shape: f32[128,32], index: 0, kind: input, shape index: {}]
  %s1 = inlined_call_operand.vmem [shape: f32[32,16], index: 1, kind: input, shape index: {}]
  %s2 = inlined_call_operand.vmem [shape: f32[1,16], index: 2, kind: input, shape index: {}]
  %s3 = inlined_call_operand.vmem [shape: f32[16,8], index: 3, kind: input, shape index: {}]
  %s4 = inlined_call_operand.vmem [shape: f32[1,8], index: 4, kind: input, shape index: {}]
  %s5 = inlined_call_operand.vmem [shape: f32[1,8], index: 5, kind: input, shape index: {}]
  %s6 = inlined_call_operand.<no memory space> [shape: f32[1,1], index: 6, kind: input, shape index: {}]
  %s7 = inlined_call_operand.hbm [shape: f32[1,128], index: 7, kind: output, shape index: {}]
  %s8 = sld [smem:[#allocation0]]
  $region38: #{tpu_custom_call.1} parent=0
    _
  %s10 = ssub.s32 1, %s8
  %s11 = scalar_select 0, %s10, %s8
  %v12 = vstv %s6
  %13 = vst [vmem:[#allocation2] sm:$0x1] %v12
  $region1: #{tpu_custom_call.1} parent=0
    #allocation3 [shape = 'u8[512]{0}', space=vmem, size = 0x400, scoped, tag = 'output window, operand 0, single buffered']
    #allocation4 [shape = 's32[1]{0}', space=sflag, size = 0x4, scoped, tag = 'scoped memory for tpu_custom_call.1']
    %14 = vsyncpa [#allocation4], 0
    // Predicated region
    $region2: #{tpu_custom_call.1} parent=1 // pred_check
      _
    $region3: #{tpu_custom_call.1} parent=1 // pred_check_branch
      %16 = sbr.rel (0) target = $region5
    $region4: #{tpu_custom_call.1} parent=1 // pred_region
      _
    $region5: #{tpu_custom_call.1} parent=1 // pred_fallthru
      _
    // Predicated region
    $region6: #{tpu_custom_call.1} parent=1 // pred_check
      _
    $region7: #{tpu_custom_call.1} parent=1 // pred_check_branch
      %18 = sbr.rel (0) target = $region9
    $region8: #{tpu_custom_call.1} parent=1 // pred_region
      _
    $region9: #{tpu_custom_call.1} parent=1 // pred_fallthru
      _
    // Predicated region
    $region10: #{tpu_custom_call.1} parent=1 // pred_check
      _
    $region11: #{tpu_custom_call.1} parent=1 // pred_check_branch
      %20 = sbr.rel (0) target = $region13
    $region12: #{tpu_custom_call.1} parent=1 // pred_region
      _
    $region13: #{tpu_custom_call.1} parent=1 // pred_fallthru
      _
    // Predicated region
    $region14: #{tpu_custom_call.1} parent=1 // pred_check
      _
    $region15: #{tpu_custom_call.1} parent=1 // pred_check_branch
      %22 = sbr.rel (0) target = $region17
    $region16: #{tpu_custom_call.1} parent=1 // pred_region
      _
    $region17: #{tpu_custom_call.1} parent=1 // pred_fallthru
      _
    // Predicated region
    $region18: #{tpu_custom_call.1} parent=1 // pred_check
      _
    $region19: #{tpu_custom_call.1} parent=1 // pred_check_branch
      %24 = sbr.rel (0) target = $region21
    $region20: #{tpu_custom_call.1} parent=1 // pred_region
      _
    $region21: #{tpu_custom_call.1} parent=1 // pred_fallthru
      _
    // Predicated region
    $region22: #{tpu_custom_call.1} parent=1 // pred_check
      _
    $region23: #{tpu_custom_call.1} parent=1 // pred_check_branch
      %26 = sbr.rel (0) target = $region25
    $region24: #{tpu_custom_call.1} parent=1 // pred_region
      _
    $region25: #{tpu_custom_call.1} parent=1 // pred_fallthru
      _
    // Predicated region
    $region26: #{tpu_custom_call.1} parent=1 // pred_check
      _
    $region27: #{tpu_custom_call.1} parent=1 // pred_check_branch
      %28 = sbr.rel (0) target = $region29
    $region28: #{tpu_custom_call.1} parent=1 // pred_region
      _
    $region29: #{tpu_custom_call.1} parent=1 // pred_fallthru
      _
    %v29 = vld [vmem:[%s0] sm:$0xff]
    %v30 = vld [vmem:[%s0 + $0x8] sm:$0xff]
    %v31 = vld [vmem:[%s0 + $0x10] sm:$0xff]
    %v32 = vld [vmem:[%s0 + $0x18] sm:$0xff]
    %v33 = vld [vmem:[%s0 + $0x20] sm:$0xff]
    %v34 = vld [vmem:[%s0 + $0x28] sm:$0xff]
    %v35 = vld [vmem:[%s0 + $0x30] sm:$0xff]
    %v36 = vld [vmem:[%s0 + $0x38] sm:$0xff]
    %v37 = vld [vmem:[%s0 + $0x40] sm:$0xff]
    %v38 = vld [vmem:[%s0 + $0x48] sm:$0xff]
    %v39 = vld [vmem:[%s0 + $0x50] sm:$0xff]
    %v40 = vld [vmem:[%s0 + $0x58] sm:$0xff]
    %v41 = vld [vmem:[%s0 + $0x60] sm:$0xff]
    %v42 = vld [vmem:[%s0 + $0x68] sm:$0xff]
    %v43 = vld [vmem:[%s0 + $0x70] sm:$0xff]
    %v44 = vld [vmem:[%s0 + $0x78] sm:$0xff]
    %v45 = vld [vmem:[%s1] sm:$0xff]
    %v46 = vld [vmem:[%s1 + $0x8] sm:$0xff]
    %v47 = vld [vmem:[%s1 + $0x10] sm:$0xff]
    %v48 = vld [vmem:[%s1 + $0x18] sm:$0xff]
    %v49 = vld [vmem:[%s2] sm:$0x1]
    %v51 = vperm.slane %v49, 0
    %vm53 = vcmask 261120
    %v55 = vsel %vm53, %v29, 0
    %v58 = vsel %vm53, %v30, 0
    %v61 = vsel %vm53, %v31, 0
    %v64 = vsel %vm53, %v32, 0
    %v67 = vsel %vm53, %v33, 0
    %v70 = vsel %vm53, %v34, 0
    %v73 = vsel %vm53, %v35, 0
    %v76 = vsel %vm53, %v36, 0
    %v79 = vsel %vm53, %v37, 0
    %v82 = vsel %vm53, %v38, 0
    %v85 = vsel %vm53, %v39, 0
    %v88 = vsel %vm53, %v40, 0
    %v91 = vsel %vm53, %v41, 0
    %v94 = vsel %vm53, %v42, 0
    %v97 = vsel %vm53, %v43, 0
    %v100 = vsel %vm53, %v44, 0
    %102 = vmatpush.msra.mxu0 0.0
    %103 = vmatpush.msra.mxu0 0.0
    %104 = vmatpush.msra.mxu0 0.0
    %105 = vmatpush.msra.mxu0 0.0
    %106 = vmatpush.msra.mxu0 0.0
    %107 = vmatpush.msra.mxu0 0.0
    %108 = vmatpush.msra.mxu0 0.0
    %109 = vmatpush.msra.mxu0 0.0
    %110 = vmatpush.msra.mxu0 0.0
    %111 = vmatpush.msra.mxu0 0.0
    %112 = vmatpush.msra.mxu0 0.0
    %113 = vmatpush.msra.mxu0 0.0
    %114 = vmatpush.msra.mxu0 %v48
    %115 = vmatpush.msra.mxu0 %v47
    %116 = vmatpush.msra.mxu0 %v46
    %117 = vmatpush.msra.mxu0 %v45
    %118 = vmatmul.f32.gmra.mxu0 %v55
    %v119 = vpop.f32.mrf.mxu0
    %v120 = vadd.f32 %v51, %v119
    %121 = vmatmul.f32.gmra.mxu0 %v58
    %v122 = vpop.f32.mrf.mxu0
    %v123 = vadd.f32 %v51, %v122
    %124 = vmatmul.f32.gmra.mxu0 %v61
    %v125 = vpop.f32.mrf.mxu0
    %v126 = vadd.f32 %v51, %v125
    %127 = vmatmul.f32.gmra.mxu0 %v64
    %v128 = vpop.f32.mrf.mxu0
    %v129 = vadd.f32 %v51, %v128
    %130 = vmatmul.f32.gmra.mxu0 %v67
    %v131 = vpop.f32.mrf.mxu0
    %v132 = vadd.f32 %v51, %v131
    %133 = vmatmul.f32.gmra.mxu0 %v70
    %v134 = vpop.f32.mrf.mxu0
    %v135 = vadd.f32 %v51, %v134
    %136 = vmatmul.f32.gmra.mxu0 %v73
    %v137 = vpop.f32.mrf.mxu0
    %v138 = vadd.f32 %v51, %v137
    %139 = vmatmul.f32.gmra.mxu0 %v76
    %v140 = vpop.f32.mrf.mxu0
    %v141 = vadd.f32 %v51, %v140
    %142 = vmatmul.f32.gmra.mxu0 %v79
    %v143 = vpop.f32.mrf.mxu0
    %v144 = vadd.f32 %v51, %v143
    %145 = vmatmul.f32.gmra.mxu0 %v82
    %v146 = vpop.f32.mrf.mxu0
    %v147 = vadd.f32 %v51, %v146
    %148 = vmatmul.f32.gmra.mxu0 %v85
    %v149 = vpop.f32.mrf.mxu0
    %v150 = vadd.f32 %v51, %v149
    %151 = vmatmul.f32.gmra.mxu0 %v88
    %v152 = vpop.f32.mrf.mxu0
    %v153 = vadd.f32 %v51, %v152
    %154 = vmatmul.f32.gmra.mxu0 %v91
    %v155 = vpop.f32.mrf.mxu0
    %v156 = vadd.f32 %v51, %v155
    %157 = vmatmul.f32.gmra.mxu0 %v94
    %v158 = vpop.f32.mrf.mxu0
    %v159 = vadd.f32 %v51, %v158
    %160 = vmatmul.f32.gmra.mxu0 %v97
    %v161 = vpop.f32.mrf.mxu0
    %v162 = vadd.f32 %v51, %v161
    %163 = vmatmul.f32.gmra.mxu0 %v100
    %v164 = vpop.f32.mrf.mxu0
    %v165 = vadd.f32 %v51, %v164
    %166 = vdwg.mxu0
    %v167 = vmax.f32 %v120, 0.0
    %v168 = vmax.f32 %v123, 0.0
    %v169 = vmax.f32 %v126, 0.0
    %v170 = vmax.f32 %v129, 0.0
    %v171 = vmax.f32 %v132, 0.0
    %v172 = vmax.f32 %v135, 0.0
    %v173 = vmax.f32 %v138, 0.0
    %v174 = vmax.f32 %v141, 0.0
    %v175 = vmax.f32 %v144, 0.0
    %v176 = vmax.f32 %v147, 0.0
    %v177 = vmax.f32 %v150, 0.0
    %v178 = vmax.f32 %v153, 0.0
    %v179 = vmax.f32 %v156, 0.0
    %v180 = vmax.f32 %v159, 0.0
    %v181 = vmax.f32 %v162, 0.0
    %v182 = vmax.f32 %v165, 0.0
    %v183 = vld [vmem:[%s3] sm:$0xff]
    %v184 = vld [vmem:[%s3 + $0x8] sm:$0xff]
    %v185 = vld [vmem:[%s4] sm:$0x1]
    %v187 = vperm.slane %v185, 0
    %vm189 = vcmask 130048
    %v191 = vsel %vm189, %v167, 0
    %v194 = vsel %vm189, %v168, 0
    %v197 = vsel %vm189, %v169, 0
    %v200 = vsel %vm189, %v170, 0
    %v203 = vsel %vm189, %v171, 0
    %v206 = vsel %vm189, %v172, 0
    %v209 = vsel %vm189, %v173, 0
    %v212 = vsel %vm189, %v174, 0
    %v215 = vsel %vm189, %v175, 0
    %v218 = vsel %vm189, %v176, 0
    %v221 = vsel %vm189, %v177, 0
    %v224 = vsel %vm189, %v178, 0
    %v227 = vsel %vm189, %v179, 0
    %v230 = vsel %vm189, %v180, 0
    %v233 = vsel %vm189, %v181, 0
    %v236 = vsel %vm189, %v182, 0
    %238 = vmatpush.msra.mxu0 0.0
    %239 = vmatpush.msra.mxu0 0.0
    %240 = vmatpush.msra.mxu0 0.0
    %241 = vmatpush.msra.mxu0 0.0
    %242 = vmatpush.msra.mxu0 0.0
    %243 = vmatpush.msra.mxu0 0.0
    %244 = vmatpush.msra.mxu0 0.0
    %245 = vmatpush.msra.mxu0 0.0
    %246 = vmatpush.msra.mxu0 0.0
    %247 = vmatpush.msra.mxu0 0.0
    %248 = vmatpush.msra.mxu0 0.0
    %249 = vmatpush.msra.mxu0 0.0
    %250 = vmatpush.msra.mxu0 0.0
    %251 = vmatpush.msra.mxu0 0.0
    %252 = vmatpush.msra.mxu0 %v184
    %253 = vmatpush.msra.mxu0 %v183
    %254 = vmatmul.f32.gmra.mxu0 %v191
    %v255 = vpop.f32.mrf.mxu0
    %v256 = vadd.f32 %v187, %v255
    %257 = vmatmul.f32.gmra.mxu0 %v194
    %v258 = vpop.f32.mrf.mxu0
    %v259 = vadd.f32 %v187, %v258
    %260 = vmatmul.f32.gmra.mxu0 %v197
    %v261 = vpop.f32.mrf.mxu0
    %v262 = vadd.f32 %v187, %v261
    %263 = vmatmul.f32.gmra.mxu0 %v200
    %v264 = vpop.f32.mrf.mxu0
    %v265 = vadd.f32 %v187, %v264
    %266 = vmatmul.f32.gmra.mxu0 %v203
    %v267 = vpop.f32.mrf.mxu0
    %v268 = vadd.f32 %v187, %v267
    %269 = vmatmul.f32.gmra.mxu0 %v206
    %v270 = vpop.f32.mrf.mxu0
    %v271 = vadd.f32 %v187, %v270
    %272 = vmatmul.f32.gmra.mxu0 %v209
    %v273 = vpop.f32.mrf.mxu0
    %v274 = vadd.f32 %v187, %v273
    %275 = vmatmul.f32.gmra.mxu0 %v212
    %v276 = vpop.f32.mrf.mxu0
    %v277 = vadd.f32 %v187, %v276
    %278 = vmatmul.f32.gmra.mxu0 %v215
    %v279 = vpop.f32.mrf.mxu0
    %v280 = vadd.f32 %v187, %v279
    %281 = vmatmul.f32.gmra.mxu0 %v218
    %v282 = vpop.f32.mrf.mxu0
    %v283 = vadd.f32 %v187, %v282
    %284 = vmatmul.f32.gmra.mxu0 %v221
    %v285 = vpop.f32.mrf.mxu0
    %v286 = vadd.f32 %v187, %v285
    %287 = vmatmul.f32.gmra.mxu0 %v224
    %v288 = vpop.f32.mrf.mxu0
    %v289 = vadd.f32 %v187, %v288
    %290 = vmatmul.f32.gmra.mxu0 %v227
    %v291 = vpop.f32.mrf.mxu0
    %v292 = vadd.f32 %v187, %v291
    %293 = vmatmul.f32.gmra.mxu0 %v230
    %v294 = vpop.f32.mrf.mxu0
    %v295 = vadd.f32 %v187, %v294
    %296 = vmatmul.f32.gmra.mxu0 %v233
    %v297 = vpop.f32.mrf.mxu0
    %v298 = vadd.f32 %v187, %v297
    %299 = vmatmul.f32.gmra.mxu0 %v236
    %v300 = vpop.f32.mrf.mxu0
    %v301 = vadd.f32 %v187, %v300
    %302 = vdwg.mxu0
    %v303 = vmax.f32 %v256, 0.0
    %v304 = vmax.f32 %v259, 0.0
    %v305 = vmax.f32 %v262, 0.0
    %v306 = vmax.f32 %v265, 0.0
    %v307 = vmax.f32 %v268, 0.0
    %v308 = vmax.f32 %v271, 0.0
    %v309 = vmax.f32 %v274, 0.0
    %v310 = vmax.f32 %v277, 0.0
    %v311 = vmax.f32 %v280, 0.0
    %v312 = vmax.f32 %v283, 0.0
    %v313 = vmax.f32 %v286, 0.0
    %v314 = vmax.f32 %v289, 0.0
    %v315 = vmax.f32 %v292, 0.0
    %v316 = vmax.f32 %v295, 0.0
    %v317 = vmax.f32 %v298, 0.0
    %v318 = vmax.f32 %v301, 0.0
    %v319 = vld [vmem:[%s5] sm:$0x1]
    %v320 = vld [vmem:[#allocation2] sm:$0x1]
    %322 = vset.pattern.permute.xlu0 0
    %323 = vperm.xlu0 %322, %v320
    %v324 = vpop.permute.xlu0 %323
    %v326 = vperm.slane %v324, 0
    %vm327 = vcmask 64512
    %v329 = vsel %vm327, %v319, 0
    %v332 = vsel %vm327, %v303, 0
    %v335 = vsel %vm327, %v304, 0
    %v338 = vsel %vm327, %v305, 0
    %v341 = vsel %vm327, %v306, 0
    %v344 = vsel %vm327, %v307, 0
    %v347 = vsel %vm327, %v308, 0
    %v350 = vsel %vm327, %v309, 0
    %v353 = vsel %vm327, %v310, 0
    %v356 = vsel %vm327, %v311, 0
    %v359 = vsel %vm327, %v312, 0
    %v362 = vsel %vm327, %v313, 0
    %v365 = vsel %vm327, %v314, 0
    %v368 = vsel %vm327, %v315, 0
    %v371 = vsel %vm327, %v316, 0
    %v374 = vsel %vm327, %v317, 0
    %v377 = vsel %vm327, %v318, 0
    %379 = vmatpush.xpose.msra.mxu0 %v377
    %380 = vmatpush.xpose.msra.mxu0 %v374
    %381 = vmatpush.xpose.msra.mxu0 %v371
    %382 = vmatpush.xpose.msra.mxu0 %v368
    %383 = vmatpush.xpose.msra.mxu0 %v365
    %384 = vmatpush.xpose.msra.mxu0 %v362
    %385 = vmatpush.xpose.msra.mxu0 %v359
    %386 = vmatpush.xpose.msra.mxu0 %v356
    %387 = vmatpush.xpose.msra.mxu0 %v353
    %388 = vmatpush.xpose.msra.mxu0 %v350
    %389 = vmatpush.xpose.msra.mxu0 %v347
    %390 = vmatpush.xpose.msra.mxu0 %v344
    %391 = vmatpush.xpose.msra.mxu0 %v341
    %392 = vmatpush.xpose.msra.mxu0 %v338
    %393 = vmatpush.xpose.msra.mxu0 %v335
    %394 = vmatpush.xpose.msra.mxu0 %v332
    %395 = vmatmul.f32.gmra.mxu0 %v329
    %v396 = vpop.f32.mrf.mxu0
    %v397 = vadd.f32 %v326, %v396
    %398 = vdwg.mxu0
    %399 = vst [vmem:[#allocation3] sm:$0x1] %v397
    // Predicated region
    $region30: #{tpu_custom_call.1} parent=1 // pred_check
      _
    $region31: #{tpu_custom_call.1} parent=1 // pred_check_branch
      %401 = sbr.rel (0) target = $region33
    $region32: #{tpu_custom_call.1} parent=1 // pred_region
      %403 = vsyncadd [#allocation4], 0
      %s405 = sshll.u32 [#allocation3], 4
      %s406 = int_to_ptr.vmem [resolvable:$true] %s405
      %s407 = sshll.u32 %s7, 4
      %s408 = int_to_ptr.hbm [resolvable:$true] %s407
      %410 = dma.vmem_to_hbm [thread:$0]  %s406, 16, %s408, [#allocation4]
    $region33: #{tpu_custom_call.1} parent=1 // pred_fallthru
      _
    // Predicated region
    $region34: #{tpu_custom_call.1} parent=1 // pred_check
      _
    $region35: #{tpu_custom_call.1} parent=1 // pred_check_branch
      %412 = sbr.rel (0) target = $region37
    $region36: #{tpu_custom_call.1} parent=1 // pred_region
      %414 = dma.done [#allocation4], 16
    $region37: #{tpu_custom_call.1} parent=1 // pred_fallthru
      _
    %415 = vsyncpa [#allocation4], 1

</llo_original>
